<compile_context>
chip_gen: v7x
topology: tpu7x:2x2x1
jax: 0.10.0
libtpu: 0.0.40
codegen_flags: <defaults>
</compile_context>

<pallas_src>
import jax
import jax.numpy as jnp
from jax.experimental import pallas as pl
from jax.experimental.pallas import tpu as pltpu


def _add_pos_kernel(x_ref, pos_ref, o_ref):
    # x_ref/o_ref: (Bt, Rt, L) tile of the flattened activations.
    # pos_ref:     (Rt, L) tile of the positional slab (broadcast over batch).
    x = x_ref[...].astype(jnp.float32)
    p = pos_ref[...].astype(jnp.float32)
    o_ref[...] = (x + p[None, :, :]).astype(o_ref.dtype)


_LANE_CANDIDATES = (4096, 2048, 1024, 512, 256, 128)
_TARGET_BLOCK_BYTES = 4 << 20   # ~4 MiB of x per grid step (review: amortize per-step overhead)
_MIN_BLOCK_BYTES = 256 << 10    # don't shrink tiles below this just to add steps
_MIN_GRID_STEPS = 8             # give the pipeline (and both v7x cores) work to overlap


def _sublane_multiple(dtype):
    """Sublane packing multiple: 8 for 4-byte, 16 for 2-byte, 32 for 1-byte."""
    return {4: 8, 2: 16, 1: 32}.get(jnp.dtype(dtype).itemsize, 8)


def _pick_lanes(total_elems, itemsize, budget):
    """Widest lane count (multiple of 128) dividing the per-sample element count."""
    for lane in _LANE_CANDIDATES:
        if total_elems % lane == 0 and lane * itemsize <= budget:
            return lane
    return None


def learnable_positional_encoding_2d(x, row_embed, col_embed, H, W, *, donate_x=False):
    """x: (B, H*W, d_model). Returns x + learnable 2-D positional encoding."""
    B, S, D = x.shape
    assert S == H * W, "x sequence length must equal H*W"
    d_half = row_embed.shape[-1]
    assert col_embed.shape[-1] == d_half and 2 * d_half == D

    # Tiny (H*W, D) positional slab -- plain JAX glue (negligible traffic).
    row_pos = jnp.broadcast_to(row_embed[:H, None, :], (H, W, d_half))
    col_pos = jnp.broadcast_to(col_embed[None, :W, :], (H, W, d_half))
    pos = jnp.concatenate([row_pos, col_pos], axis=-1).reshape(S, D).astype(jnp.float32)

    itemsize = jnp.dtype(x.dtype).itemsize
    sub = _sublane_multiple(x.dtype)

    # Per-step byte budget: ~4 MiB, but small enough that (when the data is
    # big enough) the grid has at least _MIN_GRID_STEPS steps to pipeline.
    total_bytes = B * S * D * itemsize
    budget = min(_TARGET_BLOCK_BYTES,
                 max(_MIN_BLOCK_BYTES, total_bytes // _MIN_GRID_STEPS))

    # Lane-dense flattening of the per-sample (S, D) slab when divisibility allows.
    lane = _pick_lanes(S * D, itemsize, budget)
    if lane is not None:
        L = lane
        R = (S * D) // L
        xf = x.reshape(B, R, L)
        pf = pos.reshape(R, L)
    else:
        # Fallback: natural layout; D is the full last dim (always legal).
        # D < 128 means masked partial stores -- correct, just slower.
        R, L = S, D
        xf = x
        pf = pos

    # Row tiling near the byte budget, multiple of the sublane packing; the
    # grid uses cdiv so the ragged last block is simply masked by Pallas.
    row_bytes = L * itemsize
    rows_budget = max(sub, (budget // max(row_bytes, 1)) // sub * sub)

    if rows_budget >= R:
        Rt = R  # whole per-sample slab fits one tile -> batch multiple samples
        per_sample_bytes = R * L * itemsize
        Bt = max(1, min(B, budget // max(per_sample_bytes, 1)))
    else:
        Rt = rows_budget
        Bt = 1

    grid = (pl.cdiv(R, Rt), pl.cdiv(B, Bt))  # row axis outer => pos stays put per row tile

    if Rt == R:
        # Whole pos slab resident: constant block index -> fetched exactly once.
        pos_spec = pl.BlockSpec((R, L), lambda r, b: (0, 0))
    else:
        pos_spec = pl.BlockSpec((Rt, L), lambda r, b: (r, 0))

    # Explicit scoped-VMEM limit: double-buffered x in/out tiles + pos + slack
    # (v5e's 16 MiB default would otherwise reject 4 MiB tiles).
    x_tile_bytes = Bt * Rt * L * itemsize
    pos_tile_bytes = Rt * L * 4
    vmem_limit = min(64 << 20,
                     max(16 << 20, 4 * x_tile_bytes + 2 * pos_tile_bytes + (2 << 20)))

    call_kwargs = {}
    if donate_x:
        # Only alias when the caller actually donates x; a must-alias on a
        # non-donated buffer forces XLA to insert a defensive full copy of x.
        call_kwargs["input_output_aliases"] = {0: 0}

    out = pl.pallas_call(
        _add_pos_kernel,
        out_shape=jax.ShapeDtypeStruct((B, R, L), x.dtype),
        grid=grid,
        in_specs=[
            pl.BlockSpec((Bt, Rt, L), lambda r, b: (b, r, 0)),  # x tile
            pos_spec,                                           # pos (batch-invariant)
        ],
        out_specs=pl.BlockSpec((Bt, Rt, L), lambda r, b: (b, r, 0)),
        compiler_params=pltpu.CompilerParams(
            dimension_semantics=("parallel", "parallel"),
            vmem_limit_bytes=vmem_limit,
        ),
        **call_kwargs,
    )(xf, pf)

    return out.reshape(B, S, D)


if __name__ == "__main__":
    key = jax.random.PRNGKey(0)
    k_x, k_row, k_col = jax.random.split(key, 3)

    # Shapes implied by the module: x is (B, H*W, d_model),
    # embeddings are (max_h, d_model//2) / (max_w, d_model//2).
    B, H, W, d_model = 2, 16, 16, 32
    max_h = max_w = 32

    x = jax.random.normal(k_x, (B, H * W, d_model), dtype=jnp.float32)
    row_embed = jax.random.normal(k_row, (max_h, d_model // 2), dtype=jnp.float32)
    col_embed = jax.random.normal(k_col, (max_w, d_model // 2), dtype=jnp.float32)

    # Pure-JAX reference (mirrors the PyTorch forward), computed before the
    # kernel call.
    row_pos = jnp.broadcast_to(row_embed[:H, None, :], (H, W, d_model // 2))
    col_pos = jnp.broadcast_to(col_embed[None, :W, :], (H, W, d_model // 2))
    pos_full = jnp.concatenate([row_pos, col_pos], axis=-1).reshape(1, H * W, d_model)
    ref = jax.block_until_ready(x + pos_full)

    out = learnable_positional_encoding_2d(x, row_embed, col_embed, H, W)
    out = jax.block_until_ready(out)

    assert out.shape == (B, H * W, d_model)
    assert jnp.allclose(out, ref, atol=1e-6), "mismatch vs pure-JAX reference"

    print("KERNEL_OK")
</pallas_src>

<mosaic_0001>
module attributes {stable_mosaic.version = 11 : i64} {
  func.func @_add_pos_kernel(%arg0: i32, %arg1: i32, %arg2: memref<2x2x4096xf32, #tpu.memory_space<vmem>>, %arg3: memref<2x4096xf32, #tpu.memory_space<vmem>>, %arg4: memref<2x2x4096xf32, #tpu.memory_space<vmem>>) attributes {dimension_semantics = [#tpu.dimension_semantics<parallel>, #tpu.dimension_semantics<parallel>], iteration_bounds = array<i64: 1, 1>, scalar_prefetch = 0 : i64, scratch_operands = 0 : i64, tpu.core_type = #tpu.core_type<tc>, window_params = [{transform_indices = @transform_0, window_bounds = array<i64: 2, 2, 4096>}, {pipeline_mode = #tpu.pipeline_mode<synchronous>, transform_indices = @transform_1, window_bounds = array<i64: 2, 4096>}, {transform_indices = @transform_2, window_bounds = array<i64: 2, 2, 4096>}]} {
    %c0 = arith.constant 0 : index
    %c0_0 = arith.constant 0 : index
    %c0_1 = arith.constant 0 : index
    %0 = vector.load %arg2[%c0, %c0_0, %c0_1] : memref<2x2x4096xf32, #tpu.memory_space<vmem>>, vector<2x2x4096xf32>
    %c0_2 = arith.constant 0 : index
    %c0_3 = arith.constant 0 : index
    %1 = vector.load %arg3[%c0_2, %c0_3] : memref<2x4096xf32, #tpu.memory_space<vmem>>, vector<2x4096xf32>
    %2 = vector.shape_cast %1 : vector<2x4096xf32> to vector<1x2x4096xf32>
    %3 = vector.broadcast %2 : vector<1x2x4096xf32> to vector<2x2x4096xf32>
    %4 = arith.addf %0, %3 : vector<2x2x4096xf32>
    %c0_4 = arith.constant 0 : index
    %c0_5 = arith.constant 0 : index
    %c0_6 = arith.constant 0 : index
    %5 = vector.load %arg4[%c0_4, %c0_5, %c0_6] : memref<2x2x4096xf32, #tpu.memory_space<vmem>>, vector<2x2x4096xf32>
    tpu.vector_store %arg4[%c0_4, %c0_5, %c0_6], %4 {strides = array<i32>} : memref<2x2x4096xf32, #tpu.memory_space<vmem>>, vector<2x2x4096xf32>,
    return
  }
  func.func @transform_0(%arg0: i32, %arg1: i32) -> (i32, i32, i32) {
    %c0_i32 = arith.constant 0 : i32
    %c0_i32_0 = arith.constant 0 : i32
    return %arg1, %arg0, %c0_i32 : i32, i32, i32
  }
  func.func @transform_1(%arg0: i32, %arg1: i32) -> (i32, i32) {
    %c0_i32 = arith.constant 0 : i32
    %c0_i32_0 = arith.constant 0 : i32
    %c0_i32_1 = arith.constant 0 : i32
    return %c0_i32, %c0_i32_0 : i32, i32
  }
  func.func @transform_2(%arg0: i32, %arg1: i32) -> (i32, i32, i32) {
    %c0_i32 = arith.constant 0 : i32
    %c0_i32_0 = arith.constant 0 : i32
    return %arg1, %arg0, %c0_i32 : i32, i32, i32
  }
}

</mosaic_0001>

<llo_original>
// kernel: tpu_custom_call.1
$region0: #{tpu_custom_call.1}
  #allocation0 [shape = 'u32[]', space=smem, size = 0x4, offset = 0x4, fixed_abs, tag = 'smem constant byte address 0x4 - core index']
  #allocation1 [shape = 'u32[144,128]{1,0:T(1,128)}', space=vmem, size = 0x12000, scoped, tag = 'internal scratch']
  %s0 = inlined_call_operand.hbm [shape: f32[2,2,4096], index: 0, kind: input, shape index: {}]
  %s1 = inlined_call_operand.hbm [shape: f32[2,4096], index: 1, kind: input, shape index: {}]
  %s2 = inlined_call_operand.hbm [shape: f32[2,2,4096], index: 2, kind: output, shape index: {}]
  %s3 = sld [smem:[#allocation0]]
  $region26: #{tpu_custom_call.1} parent=0
    _
  %s5 = ssub.s32 1, %s3
  %s6 = scalar_select 0, %s5, %s3
  $region1: #{tpu_custom_call.1} parent=0
    #allocation2 [shape = 'u8[65536]{0}', space=vmem, size = 0x10000, scoped, tag = 'input window, operand 0, single buffered']
    #allocation3 [shape = 's32[1]{0}', space=sflag, size = 0x4, scoped, tag = 'scoped memory for tpu_custom_call.1']
    #allocation4 [shape = 's32[1]{0}', space=sflag, size = 0x4, scoped, tag = 'scoped memory for tpu_custom_call.1']
    #allocation5 [shape = 'u8[32768]{0}', space=vmem, size = 0x8000, scoped, tag = 'input window, operand 1, single buffered']
    #allocation6 [shape = 's32[1]{0}', space=sflag, size = 0x4, scoped, tag = 'scoped memory for tpu_custom_call.1']
    #allocation7 [shape = 'u8[65536]{0}', space=vmem, size = 0x10000, scoped, tag = 'output window, operand 0, single buffered']
    %7 = vsyncpa [#allocation3], 0
    %8 = vsyncpa [#allocation6], 0
    %9 = vsyncpa [#allocation4], 0
    // Predicated region
    $region2: #{tpu_custom_call.1} parent=1 // pred_check
      _
    $region3: #{tpu_custom_call.1} parent=1 // pred_check_branch
      %11 = sbr.rel (0) target = $region5
    $region4: #{tpu_custom_call.1} parent=1 // pred_region
      %s13 = ssub.s32 2048, 2048
      %14 = vsyncadd [#allocation3], %s13
      %s15 = sshll.u32 [#allocation2], 4
      %s16 = int_to_ptr.vmem [resolvable:$true] %s15
      %21 = dma.hbm_to_vmem [thread:$0]  %s0, 2048, %s16, [#allocation3], 1024, 1024, 64
    $region5: #{tpu_custom_call.1} parent=1 // pred_fallthru
      _
    // Predicated region
    $region6: #{tpu_custom_call.1} parent=1 // pred_check
      _
    $region7: #{tpu_custom_call.1} parent=1 // pred_check_branch
      %23 = sbr.rel (0) target = $region9
    $region8: #{tpu_custom_call.1} parent=1 // pred_region
      %s25 = ssub.s32 1024, 1024
      %26 = vsyncadd [#allocation6], %s25
      %s28 = sshll.u32 [#allocation5], 4
      %s29 = int_to_ptr.vmem [resolvable:$true] %s28
      %31 = dma.hbm_to_vmem [thread:$0]  %s1, 1024, %s29, [#allocation6]
    $region9: #{tpu_custom_call.1} parent=1 // pred_fallthru
      _
    // Predicated region
    $region10: #{tpu_custom_call.1} parent=1 // pred_check
      _
    $region11: #{tpu_custom_call.1} parent=1 // pred_check_branch
      %33 = sbr.rel (0) target = $region13
    $region12: #{tpu_custom_call.1} parent=1 // pred_region
      %34 = dma.done [#allocation3], 2048
    $region13: #{tpu_custom_call.1} parent=1 // pred_fallthru
      _
    // Predicated region
    $region14: #{tpu_custom_call.1} parent=1 // pred_check
      _
    $region15: #{tpu_custom_call.1} parent=1 // pred_check_branch
      %36 = sbr.rel (0) target = $region17
    $region16: #{tpu_custom_call.1} parent=1 // pred_region
      %37 = dma.done [#allocation6], 1024
    $region17: #{tpu_custom_call.1} parent=1 // pred_fallthru
      _
    %v38 = vld [vmem:[#allocation2] sm:$0xff]
    %v39 = vld [vmem:[#allocation2 + $0x8] sm:$0xff]
    %v40 = vld [vmem:[#allocation2 + $0x10] sm:$0xff]
    %v41 = vld [vmem:[#allocation2 + $0x18] sm:$0xff]
    %v42 = vld [vmem:[#allocation2 + $0x20] sm:$0xff]
    %v43 = vld [vmem:[#allocation2 + $0x28] sm:$0xff]
    %v44 = vld [vmem:[#allocation2 + $0x30] sm:$0xff]
    %v45 = vld [vmem:[#allocation2 + $0x38] sm:$0xff]
    %v46 = vld [vmem:[#allocation2 + $0x40] sm:$0xff]
    %v47 = vld [vmem:[#allocation2 + $0x48] sm:$0xff]
    %v48 = vld [vmem:[#allocation2 + $0x50] sm:$0xff]
    %v49 = vld [vmem:[#allocation2 + $0x58] sm:$0xff]
    %v50 = vld [vmem:[#allocation2 + $0x60] sm:$0xff]
    %v51 = vld [vmem:[#allocation2 + $0x68] sm:$0xff]
    %v52 = vld [vmem:[#allocation2 + $0x70] sm:$0xff]
    %v53 = vld [vmem:[#allocation2 + $0x78] sm:$0xff]
    %v54 = vld [vmem:[#allocation5] sm:$0xff]
    %v55 = vld [vmem:[#allocation5 + $0x8] sm:$0xff]
    %v56 = vld [vmem:[#allocation5 + $0x10] sm:$0xff]
    %v57 = vld [vmem:[#allocation5 + $0x18] sm:$0xff]
    %v58 = vld [vmem:[#allocation5 + $0x20] sm:$0xff]
    %v59 = vld [vmem:[#allocation5 + $0x28] sm:$0xff]
    %v60 = vld [vmem:[#allocation5 + $0x30] sm:$0xff]
    %v61 = vld [vmem:[#allocation5 + $0x38] sm:$0xff]
    %v62 = vadd.f32 %v38, %v54
    %v63 = vadd.f32 %v39, %v55
    %v64 = vadd.f32 %v40, %v56
    %v65 = vadd.f32 %v41, %v57
    %v66 = vadd.f32 %v42, %v58
    %v67 = vadd.f32 %v43, %v59
    %v68 = vadd.f32 %v44, %v60
    %v69 = vadd.f32 %v45, %v61
    %v70 = vadd.f32 %v46, %v54
    %v71 = vadd.f32 %v47, %v55
    %v72 = vadd.f32 %v48, %v56
    %v73 = vadd.f32 %v49, %v57
    %v74 = vadd.f32 %v50, %v58
    %v75 = vadd.f32 %v51, %v59
    %v76 = vadd.f32 %v52, %v60
    %v77 = vadd.f32 %v53, %v61
    %78 = vst [vmem:[#allocation7] sm:$0xff] %v62
    %79 = vst [vmem:[#allocation7 + $0x8] sm:$0xff] %v63
    %80 = vst [vmem:[#allocation7 + $0x10] sm:$0xff] %v64
    %81 = vst [vmem:[#allocation7 + $0x18] sm:$0xff] %v65
    %82 = vst [vmem:[#allocation7 + $0x20] sm:$0xff] %v66
    %83 = vst [vmem:[#allocation7 + $0x28] sm:$0xff] %v67
    %84 = vst [vmem:[#allocation7 + $0x30] sm:$0xff] %v68
    %85 = vst [vmem:[#allocation7 + $0x38] sm:$0xff] %v69
    %86 = vst [vmem:[#allocation7 + $0x40] sm:$0xff] %v70
    %87 = vst [vmem:[#allocation7 + $0x48] sm:$0xff] %v71
    %88 = vst [vmem:[#allocation7 + $0x50] sm:$0xff] %v72
    %89 = vst [vmem:[#allocation7 + $0x58] sm:$0xff] %v73
    %90 = vst [vmem:[#allocation7 + $0x60] sm:$0xff] %v74
    %91 = vst [vmem:[#allocation7 + $0x68] sm:$0xff] %v75
    %92 = vst [vmem:[#allocation7 + $0x70] sm:$0xff] %v76
    %93 = vst [vmem:[#allocation7 + $0x78] sm:$0xff] %v77
    // Predicated region
    $region18: #{tpu_custom_call.1} parent=1 // pred_check
      _
    $region19: #{tpu_custom_call.1} parent=1 // pred_check_branch
      %95 = sbr.rel (0) target = $region21
    $region20: #{tpu_custom_call.1} parent=1 // pred_region
      %s97 = ssub.s32 2048, 2048
      %98 = vsyncadd [#allocation4], %s97
      %s99 = sshll.u32 [#allocation7], 4
      %s100 = int_to_ptr.vmem [resolvable:$true] %s99
      %105 = dma.vmem_to_hbm [thread:$0]  %s100, 2048, %s2, [#allocation4], 1024, 1024, 64
    $region21: #{tpu_custom_call.1} parent=1 // pred_fallthru
      _
    // Predicated region
    $region22: #{tpu_custom_call.1} parent=1 // pred_check
      _
    $region23: #{tpu_custom_call.1} parent=1 // pred_check_branch
      %107 = sbr.rel (0) target = $region25
    $region24: #{tpu_custom_call.1} parent=1 // pred_region
      %108 = dma.done [#allocation4], 2048
    $region25: #{tpu_custom_call.1} parent=1 // pred_fallthru
      _
    %109 = vsyncpa [#allocation3], 1
    %110 = vsyncpa [#allocation6], 1
    %111 = vsyncpa [#allocation4], 1

</llo_original>
